<compile_context>
chip_gen: v6e
topology: v6e:2x2x1
jax: 0.10.0
libtpu: 0.0.40
codegen_flags: <defaults>
</compile_context>

<pallas_src>
import jax
import jax.numpy as jnp
import numpy as np
from jax.experimental import pallas as pl
from jax.experimental.pallas import tpu as pltpu


def _lf_conv_kernel(x_ref, w_ref, b_ref, o_ref, xp_ref):
    """One (batch, channel-tile) step of the depthwise conv.

    x_ref : (1, TC, L)         input tile (channels-first, L on the lane axis)
    w_ref : (TC, K)            per-channel taps
    b_ref : (TC, 1)            per-channel bias
    o_ref : (1, TC, Lout)      output tile, Lout = L + K + 1
    xp_ref: (TC, L + 2K) f32   VMEM scratch holding the zero-padded input
    """
    tc, K = w_ref.shape
    L = x_ref.shape[2]
    Lout = o_ref.shape[2]

    # Build the zero halo in VMEM (edges re-zeroed every step: cheap, and stays correct
    # even when the parallel grid is split across TensorCores with per-core scratch).
    zeros_edge = jnp.zeros((tc, K), jnp.float32)
    xp_ref[:, :K] = zeros_edge
    xp_ref[:, K + L:2 * K + L] = zeros_edge
    xp_ref[:, K:K + L] = x_ref[0].astype(jnp.float32)

    # K shifted tap FMAs accumulated in f32 registers (pure VPU work; depthwise conv has
    # no channel contraction, hence no MXU matmul).
    acc = jnp.zeros((tc, Lout), jnp.float32)
    for k in range(K):                                   # static, tiny kernel size
        acc = acc + w_ref[:, k:k + 1].astype(jnp.float32) * xp_ref[:, k:k + Lout]
    acc = acc + b_ref[...].astype(jnp.float32)
    o_ref[0] = acc.astype(o_ref.dtype)


def _pick_tile_c(cout):
    for t in (128, 64, 32, 16, 8):
        if cout % t == 0:
            return t
    return cout          # odd / tiny channel counts: one full-channel block


def lf_conv(x, w, b):
    """LFConv forward.

    x: (B, Cin, L)   w: (Cout, K) == torch conv.weight[:, 0, 0, :]   b: (Cout,)
    groups = Cin (so Cout % Cin == 0).  Returns (B, Cout, 1, Lout), Lout = L + K + 1.
    """
    B, Cin, L = x.shape
    Cout, K = w.shape
    assert Cout % Cin == 0, "groups=in_channels requires out_channels % in_channels == 0"
    m = Cout // Cin
    Lout = L + 2 * K - (K - 1)        # = L + K + 1  (padding = K both sides, see header)

    if m > 1:
        # groups == Cin with m outputs per group: output channel o reads input channel
        # o // m.  Expand once at the boundary; the kernel then runs the depthwise path.
        x = jnp.repeat(x, m, axis=1)

    tile_c = _pick_tile_c(Cout)
    b2 = b.reshape(Cout, 1)

    out = pl.pallas_call(
        _lf_conv_kernel,
        out_shape=jax.ShapeDtypeStruct((B, Cout, Lout), x.dtype),
        grid=(B, Cout // tile_c),
        in_specs=[
            pl.BlockSpec((1, tile_c, L), lambda bi, ci: (bi, ci, 0)),
            pl.BlockSpec((tile_c, K), lambda bi, ci: (ci, 0)),
            pl.BlockSpec((tile_c, 1), lambda bi, ci: (ci, 0)),
        ],
        out_specs=pl.BlockSpec((1, tile_c, Lout), lambda bi, ci: (bi, ci, 0)),
        scratch_shapes=[pltpu.VMEM((tile_c, L + 2 * K), jnp.float32)],
        compiler_params=pltpu.CompilerParams(
            dimension_semantics=("parallel", "parallel")),
    )(x, w, b2)

    return out[:, :, None, :]   # (B, Cout, 1, Lout): keep torch's unsqueezed height dim


# ---------------------------------------------------------------------------
# Pure-JAX reference (correctness check only)
# ---------------------------------------------------------------------------
def _ref_lf_conv(x, w, b):
    B, Cin, L = x.shape
    Cout, K = w.shape
    lhs = x[:, :, None, :]                    # (B, Cin, 1, L)    NCHW
    rhs = w[:, None, None, :]                 # (Cout, 1, 1, K)   OIHW
    out = jax.lax.conv_general_dilated(
        lhs, rhs, window_strides=(1, 1), padding=((0, 0), (K, K)),
        dimension_numbers=("NCHW", "OIHW", "NCHW"),
        feature_group_count=Cin, precision=jax.lax.Precision.HIGHEST)
    return out + b.reshape(1, Cout, 1, 1)


if __name__ == "__main__":
    key = jax.random.PRNGKey(0)
    k1, k2, k3, k4, k5, k6 = jax.random.split(key, 6)

    K = 7
    bound = 1.0 / (1 * 1 * K) ** 0.5          # torch init: fan_in = (Cin/groups) * 1 * K

    # Case 1: depthwise (in_channels == out_channels) -- the typical LFConv setup.
    B, C, L = 2, 8, 64
    x1 = jax.random.normal(k1, (B, C, L), jnp.float32)
    w1 = jax.random.uniform(k2, (C, K), jnp.float32, -bound, bound)
    b1 = jax.random.uniform(k3, (C,), jnp.float32, -bound, bound)
    out1 = jax.block_until_ready(lf_conv(x1, w1, b1))
    assert out1.shape == (B, C, 1, L + K + 1)
    np.testing.assert_allclose(np.asarray(out1), np.asarray(_ref_lf_conv(x1, w1, b1)),
                               rtol=1e-5, atol=1e-5)

    # Case 2: grouped, out_channels = 2 * in_channels (groups = in_channels).
    Cin2, Cout2 = 4, 8
    x2 = jax.random.normal(k4, (B, Cin2, L), jnp.float32)
    w2 = jax.random.uniform(k5, (Cout2, K), jnp.float32, -bound, bound)
    b2 = jax.random.uniform(k6, (Cout2,), jnp.float32, -bound, bound)
    out2 = jax.block_until_ready(lf_conv(x2, w2, b2))
    assert out2.shape == (B, Cout2, 1, L + K + 1)
    np.testing.assert_allclose(np.asarray(out2), np.asarray(_ref_lf_conv(x2, w2, b2)),
                               rtol=1e-5, atol=1e-5)

    print("KERNEL_OK")
</pallas_src>

<mosaic_0001>
module attributes {stable_mosaic.version = 11 : i64} {
  func.func @_lf_conv_kernel(%arg0: i32, %arg1: i32, %arg2: memref<1x8x64xf32, #tpu.memory_space<vmem>>, %arg3: memref<8x7xf32, #tpu.memory_space<vmem>>, %arg4: memref<8x1xf32, #tpu.memory_space<vmem>>, %arg5: memref<1x8x72xf32, #tpu.memory_space<vmem>>, %arg6: memref<8x78xf32, #tpu.memory_space<vmem>>) attributes {dimension_semantics = [#tpu.dimension_semantics<parallel>, #tpu.dimension_semantics<parallel>], iteration_bounds = array<i64: 2, 1>, scalar_prefetch = 0 : i64, scratch_operands = 1 : i64, tpu.core_type = #tpu.core_type<tc>, window_params = [{transform_indices = @transform_0, window_bounds = array<i64: 1, 8, 64>}, {transform_indices = @transform_1, window_bounds = array<i64: 8, 7>}, {transform_indices = @transform_2, window_bounds = array<i64: 8, 1>}, {transform_indices = @transform_3, window_bounds = array<i64: 1, 8, 72>}]} {
    %cst = arith.constant 0.000000e+00 : f32
    %0 = vector.broadcast %cst : f32 to vector<8x7xf32>
    %c0 = arith.constant 0 : index
    %c0_0 = arith.constant 0 : index
    %1 = vector.load %arg6[%c0, %c0_0] : memref<8x78xf32, #tpu.memory_space<vmem>>, vector<8x7xf32>
    tpu.vector_store %arg6[%c0, %c0_0], %0 {strides = array<i32>} : memref<8x78xf32, #tpu.memory_space<vmem>>, vector<8x7xf32>,
    %c0_1 = arith.constant 0 : index
    %c71 = arith.constant 71 : index
    %2 = vector.load %arg6[%c0_1, %c71] : memref<8x78xf32, #tpu.memory_space<vmem>>, vector<8x7xf32>
    tpu.vector_store %arg6[%c0_1, %c71], %0 {strides = array<i32>} : memref<8x78xf32, #tpu.memory_space<vmem>>, vector<8x7xf32>,
    %c0_2 = arith.constant 0 : index
    %c0_3 = arith.constant 0 : index
    %c0_4 = arith.constant 0 : index
    %3 = vector.load %arg2[%c0_2, %c0_3, %c0_4] : memref<1x8x64xf32, #tpu.memory_space<vmem>>, vector<1x8x64xf32>
    %4 = vector.shape_cast %3 : vector<1x8x64xf32> to vector<8x64xf32>
    %c0_5 = arith.constant 0 : index
    %c7 = arith.constant 7 : index
    %5 = vector.load %arg6[%c0_5, %c7] : memref<8x78xf32, #tpu.memory_space<vmem>>, vector<8x64xf32>
    tpu.vector_store %arg6[%c0_5, %c7], %4 {strides = array<i32>} : memref<8x78xf32, #tpu.memory_space<vmem>>, vector<8x64xf32>,
    %cst_6 = arith.constant 0.000000e+00 : f32
    %6 = vector.broadcast %cst_6 : f32 to vector<8x72xf32>
    %c0_7 = arith.constant 0 : index
    %c0_8 = arith.constant 0 : index
    %7 = vector.load %arg3[%c0_7, %c0_8] : memref<8x7xf32, #tpu.memory_space<vmem>>, vector<8x1xf32>
    %c0_9 = arith.constant 0 : index
    %c0_10 = arith.constant 0 : index
    %8 = vector.load %arg6[%c0_9, %c0_10] : memref<8x78xf32, #tpu.memory_space<vmem>>, vector<8x72xf32>
    %9 = vector.broadcast %7 : vector<8x1xf32> to vector<8x72xf32>
    %10 = arith.mulf %9, %8 : vector<8x72xf32>
    %11 = arith.addf %6, %10 : vector<8x72xf32>
    %c0_11 = arith.constant 0 : index
    %c1 = arith.constant 1 : index
    %12 = vector.load %arg3[%c0_11, %c1] : memref<8x7xf32, #tpu.memory_space<vmem>>, vector<8x1xf32>
    %c0_12 = arith.constant 0 : index
    %c1_13 = arith.constant 1 : index
    %13 = vector.load %arg6[%c0_12, %c1_13] : memref<8x78xf32, #tpu.memory_space<vmem>>, vector<8x72xf32>
    %14 = vector.broadcast %12 : vector<8x1xf32> to vector<8x72xf32>
    %15 = arith.mulf %14, %13 : vector<8x72xf32>
    %16 = arith.addf %11, %15 : vector<8x72xf32>
    %c0_14 = arith.constant 0 : index
    %c2 = arith.constant 2 : index
    %17 = vector.load %arg3[%c0_14, %c2] : memref<8x7xf32, #tpu.memory_space<vmem>>, vector<8x1xf32>
    %c0_15 = arith.constant 0 : index
    %c2_16 = arith.constant 2 : index
    %18 = vector.load %arg6[%c0_15, %c2_16] : memref<8x78xf32, #tpu.memory_space<vmem>>, vector<8x72xf32>
    %19 = vector.broadcast %17 : vector<8x1xf32> to vector<8x72xf32>
    %20 = arith.mulf %19, %18 : vector<8x72xf32>
    %21 = arith.addf %16, %20 : vector<8x72xf32>
    %c0_17 = arith.constant 0 : index
    %c3 = arith.constant 3 : index
    %22 = vector.load %arg3[%c0_17, %c3] : memref<8x7xf32, #tpu.memory_space<vmem>>, vector<8x1xf32>
    %c0_18 = arith.constant 0 : index
    %c3_19 = arith.constant 3 : index
    %23 = vector.load %arg6[%c0_18, %c3_19] : memref<8x78xf32, #tpu.memory_space<vmem>>, vector<8x72xf32>
    %24 = vector.broadcast %22 : vector<8x1xf32> to vector<8x72xf32>
    %25 = arith.mulf %24, %23 : vector<8x72xf32>
    %26 = arith.addf %21, %25 : vector<8x72xf32>
    %c0_20 = arith.constant 0 : index
    %c4 = arith.constant 4 : index
    %27 = vector.load %arg3[%c0_20, %c4] : memref<8x7xf32, #tpu.memory_space<vmem>>, vector<8x1xf32>
    %c0_21 = arith.constant 0 : index
    %c4_22 = arith.constant 4 : index
    %28 = vector.load %arg6[%c0_21, %c4_22] : memref<8x78xf32, #tpu.memory_space<vmem>>, vector<8x72xf32>
    %29 = vector.broadcast %27 : vector<8x1xf32> to vector<8x72xf32>
    %30 = arith.mulf %29, %28 : vector<8x72xf32>
    %31 = arith.addf %26, %30 : vector<8x72xf32>
    %c0_23 = arith.constant 0 : index
    %c5 = arith.constant 5 : index
    %32 = vector.load %arg3[%c0_23, %c5] : memref<8x7xf32, #tpu.memory_space<vmem>>, vector<8x1xf32>
    %c0_24 = arith.constant 0 : index
    %c5_25 = arith.constant 5 : index
    %33 = vector.load %arg6[%c0_24, %c5_25] : memref<8x78xf32, #tpu.memory_space<vmem>>, vector<8x72xf32>
    %34 = vector.broadcast %32 : vector<8x1xf32> to vector<8x72xf32>
    %35 = arith.mulf %34, %33 : vector<8x72xf32>
    %36 = arith.addf %31, %35 : vector<8x72xf32>
    %c0_26 = arith.constant 0 : index
    %c6 = arith.constant 6 : index
    %37 = vector.load %arg3[%c0_26, %c6] : memref<8x7xf32, #tpu.memory_space<vmem>>, vector<8x1xf32>
    %c0_27 = arith.constant 0 : index
    %c6_28 = arith.constant 6 : index
    %38 = vector.load %arg6[%c0_27, %c6_28] : memref<8x78xf32, #tpu.memory_space<vmem>>, vector<8x72xf32>
    %39 = vector.broadcast %37 : vector<8x1xf32> to vector<8x72xf32>
    %40 = arith.mulf %39, %38 : vector<8x72xf32>
    %41 = arith.addf %36, %40 : vector<8x72xf32>
    %c0_29 = arith.constant 0 : index
    %c0_30 = arith.constant 0 : index
    %42 = vector.load %arg4[%c0_29, %c0_30] : memref<8x1xf32, #tpu.memory_space<vmem>>, vector<8x1xf32>
    %43 = vector.broadcast %42 : vector<8x1xf32> to vector<8x72xf32>
    %44 = arith.addf %41, %43 : vector<8x72xf32>
    %c0_31 = arith.constant 0 : index
    %c0_32 = arith.constant 0 : index
    %c0_33 = arith.constant 0 : index
    %45 = vector.load %arg5[%c0_31, %c0_32, %c0_33] : memref<1x8x72xf32, #tpu.memory_space<vmem>>, vector<1x8x72xf32>
    %46 = vector.shape_cast %45 : vector<1x8x72xf32> to vector<8x72xf32>
    %47 = vector.shape_cast %44 : vector<8x72xf32> to vector<1x8x72xf32>
    tpu.vector_store %arg5[%c0_31, %c0_32, %c0_33], %47 {strides = array<i32>} : memref<1x8x72xf32, #tpu.memory_space<vmem>>, vector<1x8x72xf32>,
    return
  }
  func.func @transform_0(%arg0: i32, %arg1: i32) -> (i32, i32, i32) {
    %c0_i32 = arith.constant 0 : i32
    %c0_i32_0 = arith.constant 0 : i32
    return %arg0, %arg1, %c0_i32 : i32, i32, i32
  }
  func.func @transform_1(%arg0: i32, %arg1: i32) -> (i32, i32) {
    %c0_i32 = arith.constant 0 : i32
    %c0_i32_0 = arith.constant 0 : i32
    return %arg1, %c0_i32 : i32, i32
  }
  func.func @transform_2(%arg0: i32, %arg1: i32) -> (i32, i32) {
    %c0_i32 = arith.constant 0 : i32
    %c0_i32_0 = arith.constant 0 : i32
    return %arg1, %c0_i32 : i32, i32
  }
  func.func @transform_3(%arg0: i32, %arg1: i32) -> (i32, i32, i32) {
    %c0_i32 = arith.constant 0 : i32
    %c0_i32_0 = arith.constant 0 : i32
    return %arg0, %arg1, %c0_i32 : i32, i32, i32
  }
}

</mosaic_0001>

<llo_original>
// kernel: tpu_custom_call.1
$region0: #{tpu_custom_call.1}
  #allocation0 [shape = 'u32[]', space=smem, size = 0x4, offset = 0x4, fixed_abs, tag = 'smem constant byte address 0x4 - core index']
  #allocation1 [shape = 'u32[144,128]{1,0:T(1,128)}', space=vmem, size = 0x12000, scoped, tag = 'internal scratch']
  #allocation2 [shape = 'f32[8,78]{1,0:T(8,128)}', space=vmem, size = 0x1000, scoped, tag = 'scratch operand']
  %s0 = inlined_call_operand.hbm [shape: f32[2,8,64], index: 0, kind: input, shape index: {}]
  %s1 = inlined_call_operand.vmem [shape: f32[8,7], index: 1, kind: input, shape index: {}]
  %s2 = inlined_call_operand.vmem [shape: f32[8,1], index: 2, kind: input, shape index: {}]
  %s3 = inlined_call_operand.hbm [shape: f32[2,8,72], index: 3, kind: output, shape index: {}]
  %s4 = sld [smem:[#allocation0]]
  $region49: #{tpu_custom_call.1} parent=0
    _
  %s6 = ssub.s32 1, %s4
  %s7 = scalar_select 0, %s6, %s4
  $region1: #{tpu_custom_call.1} parent=0
    #allocation3 [shape = 'u8[8192]{0}', space=vmem, size = 0x2000, scoped, tag = 'input window, operand 0']
    #allocation4 [shape = 's32[2]{0}', space=sflag, size = 0x8, scoped, tag = 'scoped memory for tpu_custom_call.1']
    #allocation5 [shape = 's32[2]{0}', space=sflag, size = 0x8, scoped, tag = 'scoped memory for tpu_custom_call.1']
    #allocation6 [shape = 'u8[8192]{0}', space=vmem, size = 0x2000, scoped, tag = 'output window, operand 0']
    %8 = vsyncpa [#allocation4], 0
    %s9 = scalar_lea.sflag [#allocation4], 1
    %10 = vsyncpa %s9, 0
    %11 = vsyncpa [#allocation5], 0
    %s12 = scalar_lea.sflag [#allocation5], 1
    %13 = vsyncpa %s12, 0
    loop: start=0, step=1, limit=4
    $region2: #{tpu_custom_call.1} parent=1 // loop_pre_header
      _
    $region3: #{tpu_custom_call.1} parent=1 // loop_header
      %s15 = sphi 0, %s19
      %p16 = scmp.ge.s32.totalorder %s15, 4
      %s22 = sphi 0, %s34
      %s23 = sphi 0, %s30
      %s24 = sphi 0, %s22
      %s25 = sphi 0, %s23
      %s26 = sphi 0, %s24
      %s27 = sphi 0, %s25
      %s39 = sphi 0, %s41
      %s42 = sphi 0, %s39
      %s43 = sphi 0, %s42
      %s59 = sphi 0, %s43
      %s65 = sphi 0, %s67
      %s68 = sphi 0, %s65
      %s69 = sphi 0, %s68
      %s85 = sphi 0, %s69
      %s91 = sphi 0, %s93
      %s94 = sphi 0, %s91
      %s95 = sphi 0, %s94
      %s111 = sphi 0, %s95
      %s119 = sphi 0, %s121
      %s122 = sphi 0, %s119
      %s123 = sphi 0, %s122
      %s139 = sphi 0, %s123
    $region4: #{tpu_custom_call.1} parent=1 // loop_header_branch
      %18 = sbr.rel (%p16) target = $region8
    $region5: #{tpu_custom_call.1} parent=1 // loop_body
      %s20 = ssub.s32 %s15, 1
      %s21 = ssub.s32 %s15, 2
      %s28 = sadd.s32 1, %s23
      %p29 = scmp.ge.s32.totalorder %s28, 1
      %s30 = scalar_select %p29, 0, %s28
      %s31 = sadd.s32 1, %s22
      %s32 = scalar_select %p29, %s31, %s22
      %p33 = scmp.ge.s32.totalorder %s32, 2
      %s34 = scalar_select %p33, 0, %s32
      %s35 = ssub.s32 %s22, %s34
      %s36 = ssub.s32 %s23, %s30
      %s37 = sor.u32 %s35, %s36
      %p38 = scmp.eq.s32.totalorder %s37, 0
      %s40 = sadd.s32 %s39, 1
      %s41 = scalar_select %p38, %s39, %s40
      %p44 = pneg %p38
      %p45 = scmp.eq.s32.totalorder %s15, 1
      %p46 = por %p44, %p45
      %p47 = scmp.ne.s32.totalorder %s39, %s42
      %p48 = scmp.eq.s32.totalorder %s15, 0
      %p49 = por %p47, %p48
      %p50 = scmp.ne.s32.totalorder %s39, %s42
      %p51 = scmp.eq.s32.totalorder %s20, 1
      %p52 = por %p50, %p51
      %p53 = scmp.ne.s32.totalorder %s42, %s43
      %p54 = scmp.eq.s32.totalorder %s20, 0
      %p55 = por %p53, %p54
      %p56 = scmp.ne.s32.totalorder %s42, %s43
      %p57 = scmp.eq.s32.totalorder %s21, 1
      %p58 = por %p56, %p57
      %p60 = scmp.ne.s32.totalorder %s43, %s59
      %p61 = scmp.eq.s32.totalorder %s21, 0
      %p62 = por %p60, %p61
      %s63 = ssub.s32 %s23, %s30
      %p64 = scmp.eq.s32.totalorder %s63, 0
      %s66 = sadd.s32 %s65, 1
      %s67 = scalar_select %p64, %s65, %s66
      %p70 = pneg %p64
      %p71 = scmp.eq.s32.totalorder %s15, 1
      %p72 = por %p70, %p71
      %p73 = scmp.ne.s32.totalorder %s65, %s68
      %p74 = scmp.eq.s32.totalorder %s15, 0
      %p75 = por %p73, %p74
      %p76 = scmp.ne.s32.totalorder %s65, %s68
      %p77 = scmp.eq.s32.totalorder %s20, 1
      %p78 = por %p76, %p77
      %p79 = scmp.ne.s32.totalorder %s68, %s69
      %p80 = scmp.eq.s32.totalorder %s20, 0
      %p81 = por %p79, %p80
      %p82 = scmp.ne.s32.totalorder %s68, %s69
      %p83 = scmp.eq.s32.totalorder %s21, 1
      %p84 = por %p82, %p83
      %p86 = scmp.ne.s32.totalorder %s69, %s85
      %p87 = scmp.eq.s32.totalorder %s21, 0
      %p88 = por %p86, %p87
      %s89 = ssub.s32 %s23, %s30
      %p90 = scmp.eq.s32.totalorder %s89, 0
      %s92 = sadd.s32 %s91, 1
      %s93 = scalar_select %p90, %s91, %s92
      %p96 = pneg %p90
      %p97 = scmp.eq.s32.totalorder %s15, 1
      %p98 = por %p96, %p97
      %p99 = scmp.ne.s32.totalorder %s91, %s94
      %p100 = scmp.eq.s32.totalorder %s15, 0
      %p101 = por %p99, %p100
      %p102 = scmp.ne.s32.totalorder %s91, %s94
      %p103 = scmp.eq.s32.totalorder %s20, 1
      %p104 = por %p102, %p103
      %p105 = scmp.ne.s32.totalorder %s94, %s95
      %p106 = scmp.eq.s32.totalorder %s20, 0
      %p107 = por %p105, %p106
      %p108 = scmp.ne.s32.totalorder %s94, %s95
      %p109 = scmp.eq.s32.totalorder %s21, 1
      %p110 = por %p108, %p109
      %p112 = scmp.ne.s32.totalorder %s95, %s111
      %p113 = scmp.eq.s32.totalorder %s21, 0
      %p114 = por %p112, %p113
      %s115 = ssub.s32 %s22, %s34
      %s116 = ssub.s32 %s23, %s30
      %s117 = sor.u32 %s115, %s116
      %p118 = scmp.eq.s32.totalorder %s117, 0
      %s120 = sadd.s32 %s119, 1
      %s121 = scalar_select %p118, %s119, %s120
      %p124 = pneg %p118
      %p125 = scmp.eq.s32.totalorder %s15, 1
      %p126 = por %p124, %p125
      %p127 = scmp.ne.s32.totalorder %s119, %s122
      %p128 = scmp.eq.s32.totalorder %s15, 0
      %p129 = por %p127, %p128
      %p130 = scmp.ne.s32.totalorder %s119, %s122
      %p131 = scmp.eq.s32.totalorder %s20, 1
      %p132 = por %p130, %p131
      %p133 = scmp.ne.s32.totalorder %s122, %s123
      %p134 = scmp.eq.s32.totalorder %s20, 0
      %p135 = por %p133, %p134
      %p136 = scmp.ne.s32.totalorder %s122, %s123
      %p137 = scmp.eq.s32.totalorder %s21, 1
      %p138 = por %p136, %p137
      %p140 = scmp.ne.s32.totalorder %s123, %s139
      %p141 = scmp.eq.s32.totalorder %s21, 0
      %p142 = por %p140, %p141
      %p143 = scmp.le.s32.totalorder 1, %s15
      %p144 = scmp.lt.s32.totalorder %s15, 3
      %p145 = pnand %p143, %p144
      %p146 = pneg %p145
      // Predicated region
      $region9: #{tpu_custom_call.1} parent=5 // pred_check
        _
      $region10: #{tpu_custom_call.1} parent=5 // pred_check_branch
        %148 = sbr.rel (%p145) target = $region12
      $region11: #{tpu_custom_call.1} parent=5 // pred_region
        %s149 = ssub.s32 %s15, 1
        // Predicated region
        $region13: #{tpu_custom_call.1} parent=11 // pred_check
          %p150 = pneg %p81
        $region14: #{tpu_custom_call.1} parent=11 // pred_check_branch
          %152 = sbr.rel (%p150) target = $region16
        $region15: #{tpu_custom_call.1} parent=11 // pred_region
          %p153 = scmp.lt.s32.totalorder %s25, 0
          %s154 = scalar_select %p153, %s25, 0
          %s155 = smul.addr %s154, 8
          %s156 = scalar_lea.vmem %s1, %s155
        $region16: #{tpu_custom_call.1} parent=11 // pred_fallthru
          _
        // Predicated region
        $region17: #{tpu_custom_call.1} parent=11 // pred_check
          %p157 = pneg %p107
        $region18: #{tpu_custom_call.1} parent=11 // pred_check_branch
          %159 = sbr.rel (%p157) target = $region20
        $region19: #{tpu_custom_call.1} parent=11 // pred_region
          %p160 = scmp.lt.s32.totalorder %s25, 0
          %s161 = scalar_select %p160, %s25, 0
          %s162 = smul.addr %s161, 8
          %s163 = scalar_lea.vmem %s2, %s162
        $region20: #{tpu_custom_call.1} parent=11 // pred_fallthru
          _
      $region12: #{tpu_custom_call.1} parent=5 // pred_fallthru
        _
      %p164 = scmp.lt.s32.totalorder %s15, 2
      // Predicated region
      $region21: #{tpu_custom_call.1} parent=5 // pred_check
        %p165 = pneg %p164
      $region22: #{tpu_custom_call.1} parent=5 // pred_check_branch
        %167 = sbr.rel (%p165) target = $region24
      $region23: #{tpu_custom_call.1} parent=5 // pred_region
        // Predicated region
        $region25: #{tpu_custom_call.1} parent=23 // pred_check
          %p168 = pneg %p49
        $region26: #{tpu_custom_call.1} parent=23 // pred_check_branch
          %170 = sbr.rel (%p168) target = $region28
        $region27: #{tpu_custom_call.1} parent=23 // pred_region
          %s171 = sand.u32 %s39, 1
          %s172 = scalar_lea.sflag [#allocation4], %s171
          %s173 = sand.u32 %s39, 1
          %s174 = smul.addr %s173, 8
          %s175 = scalar_lea.vmem [#allocation3], %s174
          %s177 = ssub.s32 128, 128
          %178 = vsyncadd %s172, %s177
          %s179 = sadd.s32 %s23, %s22
          %s180 = smul.addr %s179, 128
          %s181 = scalar_lea.hbm %s0, %s180
          %s183 = sshll.u32 %s175, 4
          %s184 = int_to_ptr.vmem [resolvable:$true] %s183
          %186 = dma.hbm_to_vmem [thread:$0]  %s181, 128, %s184, %s172
        $region28: #{tpu_custom_call.1} parent=23 // pred_fallthru
          _
      $region24: #{tpu_custom_call.1} parent=5 // pred_fallthru
        _
      %p187 = scmp.le.s32.totalorder 1, %s15
      %p188 = scmp.lt.s32.totalorder %s15, 3
      %p189 = pnand %p187, %p188
      %p190 = pneg %p189
      // Predicated region
      $region29: #{tpu_custom_call.1} parent=5 // pred_check
        _
      $region30: #{tpu_custom_call.1} parent=5 // pred_check_branch
        %192 = sbr.rel (%p189) target = $region32
      $region31: #{tpu_custom_call.1} parent=5 // pred_region
        %s193 = ssub.s32 %s15, 1
        %s194 = sand.u32 %s42, 1
        %s195 = scalar_lea.sflag [#allocation4], %s194
        %s196 = sand.u32 %s42, 1
        %s197 = smul.addr %s196, 8
        %s198 = scalar_lea.vmem [#allocation3], %s197
        // Predicated region
        $region33: #{tpu_custom_call.1} parent=31 // pred_check
          %p199 = pneg %p55
        $region34: #{tpu_custom_call.1} parent=31 // pred_check_branch
          %201 = sbr.rel (%p199) target = $region36
        $region35: #{tpu_custom_call.1} parent=31 // pred_region
          %202 = dma.done %s195, 128
        $region36: #{tpu_custom_call.1} parent=31 // pred_fallthru
          _
        %s203 = sand.u32 %s42, 1
        %s204 = scalar_lea.sflag [#allocation4], %s203
        %s205 = sand.u32 %s42, 1
        %s206 = smul.addr %s205, 8
        %s207 = scalar_lea.vmem [#allocation3], %s206
        %p208 = pneg %p55
        %p209 = pneg %p52
        %p210 = scmp.lt.s32.totalorder %s25, 0
        %s211 = scalar_select %p210, %s25, 0
        %s212 = smul.addr %s211, 8
        %s213 = scalar_lea.vmem %s1, %s212
        %p214 = pneg %p81
        %p215 = pneg %p78
        %p216 = scmp.lt.s32.totalorder %s25, 0
        %s217 = scalar_select %p216, %s25, 0
        %s218 = smul.addr %s217, 8
        %s219 = scalar_lea.vmem %s2, %s218
        %p220 = pneg %p107
        %p221 = pneg %p104
        %p222 = pneg %p135
        %p223 = pneg %p132
        %s224 = sand.u32 %s122, 1
        %s225 = scalar_lea.sflag [#allocation5], %s224
        %s226 = sand.u32 %s122, 1
        %s227 = smul.addr %s226, 8
        %s228 = scalar_lea.vmem [#allocation6], %s227
        %p229 = scmp.lt.s32.totalorder %s25, 0
        %s230 = scalar_select %p229, %s25, 0
        %s231 = smul.addr %s230, 8
        %s232 = scalar_lea.vmem %s1, %s231
        %p233 = scmp.lt.s32.totalorder %s25, 0
        %s234 = scalar_select %p233, %s25, 0
        %s235 = smul.addr %s234, 8
        %s236 = scalar_lea.vmem %s2, %s235
        %vm237 = vcmask 56320
        %238 = vst.msk [vmem:[#allocation2] sm:$0xff] %vm237, 0.0
        %vm239 = vcmask 638520
        %240 = vst.msk [vmem:[#allocation2] sm:$0xff] %vm239, 0.0
        %v241 = vld [vmem:[%s198] sm:$0xff]
        %243 = vrot.lane.b32.xlu0 %v241, 7
        %v244 = vpop.permute.xlu0 %243
        %vm246 = vcmask 580664
        %247 = vst.msk [vmem:[#allocation2] sm:$0xff] %vm246, %v244
        %v248 = vld [vmem:[%s232] sm:$0xff]
        %v249 = vld [vmem:[#allocation2] sm:$0xff]
        %251 = vset.pattern.permute.xlu0 0
        %252 = vperm.xlu0 %251, %v248
        %v253 = vpop.permute.xlu0 %252
        %v255 = vmul.f32 %v253, %v249
        %v256 = vadd.f32 %v255, 0.0
        %257 = vset.pattern.permute.xlu0 1
        %258 = vperm.xlu0 %257, %v248
        %v259 = vpop.permute.xlu0 %258
        %v261 = vmul.f32 %v259, %v249
        %263 = vrot.lane.b32.xlu0 %v261, 127
        %v264 = vpop.permute.xlu0 %263
        %v266 = vadd.f32 %v256, %v264
        %267 = vset.pattern.permute.xlu0 2
        %268 = vperm.xlu0 %267, %v248
        %v269 = vpop.permute.xlu0 %268
        %v271 = vmul.f32 %v269, %v249
        %273 = vrot.lane.b32.xlu0 %v271, 126
        %v274 = vpop.permute.xlu0 %273
        %v276 = vadd.f32 %v266, %v274
        %277 = vset.pattern.permute.xlu0 3
        %278 = vperm.xlu0 %277, %v248
        %v279 = vpop.permute.xlu0 %278
        %v281 = vmul.f32 %v279, %v249
        %283 = vrot.lane.b32.xlu0 %v281, 125
        %v284 = vpop.permute.xlu0 %283
        %v286 = vadd.f32 %v276, %v284
        %287 = vset.pattern.permute.xlu0 4
        %288 = vperm.xlu0 %287, %v248
        %v289 = vpop.permute.xlu0 %288
        %v291 = vmul.f32 %v289, %v249
        %293 = vrot.lane.b32.xlu0 %v291, 124
        %v294 = vpop.permute.xlu0 %293
        %v296 = vadd.f32 %v286, %v294
        %297 = vset.pattern.permute.xlu0 5
        %298 = vperm.xlu0 %297, %v248
        %v299 = vpop.permute.xlu0 %298
        %v301 = vmul.f32 %v299, %v249
        %303 = vrot.lane.b32.xlu0 %v301, 123
        %v304 = vpop.permute.xlu0 %303
        %v306 = vadd.f32 %v296, %v304
        %307 = vset.pattern.permute.xlu0 6
        %308 = vperm.xlu0 %307, %v248
        %v309 = vpop.permute.xlu0 %308
        %v311 = vmul.f32 %v309, %v249
        %313 = vrot.lane.b32.xlu0 %v311, 122
        %v314 = vpop.permute.xlu0 %313
        %v316 = vadd.f32 %v306, %v314
        %v317 = vld [vmem:[%s236] sm:$0xff]
        %319 = vset.pattern.permute.xlu0 0
        %320 = vperm.xlu0 %319, %v317
        %v321 = vpop.permute.xlu0 %320
        %v323 = vadd.f32 %v316, %v321
        %vm324 = vcmask 588800
        %325 = vst.msk [vmem:[%s228] sm:$0xff] %vm324, %v323
        %s326 = sand.u32 %s122, 1
        %s327 = scalar_lea.sflag [#allocation5], %s326
        %s328 = sand.u32 %s122, 1
        %s329 = smul.addr %s328, 8
        %s330 = scalar_lea.vmem [#allocation6], %s329
        // Predicated region
        $region37: #{tpu_custom_call.1} parent=31 // pred_check
          %p331 = pneg %p132
        $region38: #{tpu_custom_call.1} parent=31 // pred_check_branch
          %333 = sbr.rel (%p331) target = $region40
        $region39: #{tpu_custom_call.1} parent=31 // pred_region
          %s335 = ssub.s32 128, 128
          %336 = vsyncadd %s327, %s335
          %s337 = sadd.s32 %s25, %s24
          %s338 = smul.addr %s337, 128
          %s339 = scalar_lea.hbm %s3, %s338
          %s341 = sshll.u32 %s330, 4
          %s342 = int_to_ptr.vmem [resolvable:$true] %s341
          %344 = dma.vmem_to_hbm [thread:$0]  %s342, 128, %s339, %s327
        $region40: #{tpu_custom_call.1} parent=31 // pred_fallthru
          _
      $region32: #{tpu_custom_call.1} parent=5 // pred_fallthru
        _
      %p345 = scmp.le.s32.totalorder 2, %s15
      // Predicated region
      $region41: #{tpu_custom_call.1} parent=5 // pred_check
        %p346 = pneg %p345
      $region42: #{tpu_custom_call.1} parent=5 // pred_check_branch
        %348 = sbr.rel (%p346) target = $region44
      $region43: #{tpu_custom_call.1} parent=5 // pred_region
        %s349 = ssub.s32 %s15, 2
        // Predicated region
        $region45: #{tpu_custom_call.1} parent=43 // pred_check
          %p350 = pneg %p138
        $region46: #{tpu_custom_call.1} parent=43 // pred_check_branch
          %352 = sbr.rel (%p350) target = $region48
        $region47: #{tpu_custom_call.1} parent=43 // pred_region
          %s353 = sand.u32 %s123, 1
          %s354 = scalar_lea.sflag [#allocation5], %s353
          %s355 = sand.u32 %s123, 1
          %s356 = smul.addr %s355, 8
          %s357 = scalar_lea.vmem [#allocation6], %s356
          %358 = dma.done %s354, 128
        $region48: #{tpu_custom_call.1} parent=43 // pred_fallthru
          _
      $region44: #{tpu_custom_call.1} parent=5 // pred_fallthru
        _
    $region6: #{tpu_custom_call.1} parent=1 // loop_footer
      %s19 = sadd.s32 1, %s15
    $region7: #{tpu_custom_call.1} parent=1 // loop_footer_branch
      %14 = sbr.rel target = $region3
    $region8: #{tpu_custom_call.1} parent=1 // loop_exit
      _
    %359 = vsyncpa [#allocation4], 1
    %s360 = scalar_lea.sflag [#allocation4], 1
    %361 = vsyncpa %s360, 1
    %362 = vsyncpa [#allocation5], 1
    %s363 = scalar_lea.sflag [#allocation5], 1
    %364 = vsyncpa %s363, 1

</llo_original>
